<compile_context>
chip_gen: v7x
topology: tpu7x:2x2x1
jax: 0.10.0
libtpu: 0.0.40
codegen_flags: <defaults>
</compile_context>

<pallas_src>
import functools

import jax
import jax.numpy as jnp
from jax.experimental import pallas as pl
from jax.experimental.pallas import tpu as pltpu


def _round_up(x, m):
    return (x + m - 1) // m * m


def _phys_bytes(shape, itemsize):
    """Physical VMEM bytes of a block: last two dims padded to (sublane, 128)."""
    shape = tuple(shape)
    if len(shape) < 2:
        shape = (1,) * (2 - len(shape)) + shape
    sublane = 8 * max(1, 4 // itemsize)          # f32:8, bf16:16, int8:32
    lead = 1
    for s in shape[:-2]:
        lead *= int(s)
    return lead * _round_up(int(shape[-2]), sublane) * _round_up(int(shape[-1]), 128) * itemsize


def _vmem_capacity_bytes():
    """Physical VMEM per TensorCore; conservative (v7x) fallback if unknown."""
    try:
        info = pltpu.get_tpu_info()
        cap = getattr(info, "vmem_capacity_bytes", None)
        if cap:
            return int(cap)
    except Exception:
        pass
    return 64 * (1 << 20)


def _graph_conv_kernel(x_ref, a_ref, wx_ref, wa_ref, b_ref, o_ref, *,
                       agg_first, fuse_bn):
    # x_ref : (Bb, N, D)   features block
    # a_ref : (Bb, N, N)   adjacency block
    # wx_ref: (D, F)       weight[:D]  (applied to raw features)
    # wa_ref: (D, F)       weight[D:]  (applied to aggregated features)
    # b_ref : (1, F)       bias
    # o_ref : (Bb, N, F)
    bb, n, d = x_ref.shape
    f = o_ref.shape[-1]
    native = x_ref.dtype

    x = x_ref[...]
    a = a_ref[...]
    wx = wx_ref[...]
    wa = wa_ref[...]

    if fuse_bn:
        # Flatten (Bb, N) into one fat MXU "M" dimension (free view: N % 8 == 0).
        xm = x.reshape(bb * n, d)
        acc = jnp.dot(xm, wx, preferred_element_type=jnp.float32)       # (Bb*N, F)
        if agg_first:
            # (A @ X) @ W_a   -- only when D (and F) are lane-dense (>=128)
            agg = jnp.einsum('bnm,bmd->bnd', a, x,
                             preferred_element_type=jnp.float32).astype(native)
            acc = acc + jnp.dot(agg.reshape(bb * n, d), wa,
                                preferred_element_type=jnp.float32)
        else:
            # A @ (X @ W_a)   -- keeps every intermediate F lanes wide
            xw = jnp.dot(xm, wa, preferred_element_type=jnp.float32)    # (Bb*N, F)
            agg = jnp.einsum('bnm,bmf->bnf', a,
                             xw.reshape(bb, n, f).astype(native),
                             preferred_element_type=jnp.float32)        # (Bb, N, F)
            acc = acc + agg.reshape(bb * n, f)
        out = jnp.maximum(acc + b_ref[...], 0.0)                        # bias + relu
        o_ref[...] = out.reshape(bb, n, f).astype(o_ref.dtype)
    else:
        # Ragged N (not a multiple of 8): stay 3-D, no cross-tile reshape.
        acc = jnp.einsum('bnd,df->bnf', x, wx, preferred_element_type=jnp.float32)
        if agg_first:
            agg = jnp.einsum('bnm,bmd->bnd', a, x,
                             preferred_element_type=jnp.float32).astype(native)
            acc = acc + jnp.einsum('bnd,df->bnf', agg, wa,
                                   preferred_element_type=jnp.float32)
        else:
            xw = jnp.einsum('bnd,df->bnf', x, wa,
                            preferred_element_type=jnp.float32).astype(native)
            acc = acc + jnp.einsum('bnm,bmf->bnf', a, xw,
                                   preferred_element_type=jnp.float32)
        out = jnp.maximum(acc + b_ref[...], 0.0)                        # (1,F) broadcasts
        o_ref[...] = out.astype(o_ref.dtype)


def graph_conv(features, A, weight, bias, *, batch_block=None):
    """features: (B, N, D), A: (B, N, N), weight: (2D, F), bias: (F,) -> (B, N, F)."""
    b, n, d = features.shape
    two_d, f = weight.shape
    assert two_d == 2 * d
    assert A.shape == (b, n, n)

    itemsize = jnp.dtype(features.dtype).itemsize

    # Split the weight:  concat([X, AX]) @ W == X @ W[:d] + (A X) @ W[d:]
    w_x = weight[:d]
    w_a = weight[d:]
    bias2d = bias.reshape(1, f)

    # ---- association / layout choices (static) -----------------------------
    if d >= 128 and f >= 128:
        agg_first = d <= f           # FLOP rule, both sides lane-dense
    else:
        agg_first = d >= 128         # lane-density rule (D<128 -> project first)
    fuse_bn = (n % 8 == 0) or (b == 1)

    # ---- generation-aware VMEM budget --------------------------------------
    vmem_cap = _vmem_capacity_bytes()            # 128 MiB v5e/v6e, 64 MiB v7x
    budget = int(0.45 * vmem_cap)                # double-buffered working set

    # Single-buffer the grid-invariant weights/bias when they are large.
    big_weights = _phys_bytes((d, f), itemsize) > (1 << 20)
    w_bufs = 1 if big_weights else 2

    def _step_bytes(bb_):
        by = 2 * _phys_bytes((bb_, n, d), itemsize)        # X block, 2 bufs
        by += 2 * _phys_bytes((bb_, n, n), itemsize)       # A block, 2 bufs
        by += 2 * _phys_bytes((bb_, n, f), itemsize)       # out block, 2 bufs
        by += 2 * w_bufs * _phys_bytes((d, f), itemsize)   # W_x + W_a
        by += w_bufs * _phys_bytes((1, f), itemsize)       # bias
        # f32 intermediates (accumulator + agg/xw temp), tile-padded
        by += 2 * _phys_bytes((bb_ * n, f), 4)
        by += _phys_bytes((bb_ * n, max(d, f)), 4)
        return by

    # ---- batch blocking -----------------------------------------------------
    if batch_block is None:
        # Keep >= 2 grid steps when b >= 2 (v7x dual-TC sharding, pipelining),
        # otherwise pick the largest divisor of b whose footprint fits budget.
        cap = max(1, b // 2) if b >= 2 else 1
        batch_block = 1
        for cand in range(1, b + 1):
            if b % cand != 0 or cand > cap:
                continue
            if _step_bytes(cand) <= budget:
                batch_block = cand
    bb_ = max(1, min(int(batch_block), b))
    while b % bb_ != 0:
        bb_ -= 1
    grid = (b // bb_,)

    vmem_limit = int(min(0.94 * vmem_cap, max(2 * _step_bytes(bb_), 32 * (1 << 20))))

    # ---- cost estimate (advisory) -------------------------------------------
    agg_flops = 2 * b * n * n * (d if agg_first else f)
    proj_flops = 2 * b * n * (2 * d) * f
    bytes_accessed = (features.size + A.size + weight.size + bias.size) * itemsize \
        + b * n * f * itemsize
    cost = pl.CostEstimate(flops=int(agg_flops + proj_flops), transcendentals=0,
                           bytes_accessed=int(bytes_accessed))

    w_spec_kwargs = {}
    if big_weights:
        w_spec_kwargs = dict(pipeline_mode=pl.Buffered(1))

    kernel = functools.partial(_graph_conv_kernel,
                               agg_first=agg_first, fuse_bn=fuse_bn)

    out = pl.pallas_call(
        kernel,
        out_shape=jax.ShapeDtypeStruct((b, n, f), features.dtype),
        grid_spec=pltpu.PrefetchScalarGridSpec(
            num_scalar_prefetch=0,
            grid=grid,
            in_specs=[
                pl.BlockSpec((bb_, n, d), lambda i: (i, 0, 0)),            # X
                pl.BlockSpec((bb_, n, n), lambda i: (i, 0, 0)),            # A
                pl.BlockSpec((d, f), lambda i: (0, 0), **w_spec_kwargs),   # W_x
                pl.BlockSpec((d, f), lambda i: (0, 0), **w_spec_kwargs),   # W_a
                pl.BlockSpec((1, f), lambda i: (0, 0), **w_spec_kwargs),   # bias
            ],
            out_specs=pl.BlockSpec((bb_, n, f), lambda i: (i, 0, 0)),
        ),
        compiler_params=pltpu.CompilerParams(
            dimension_semantics=("parallel",),        # batch axis -> megacore/2-TC
            vmem_limit_bytes=vmem_limit),
        cost_estimate=cost,
    )(features, A, w_x, w_a, bias2d)

    return out


def reference(features, A, weight, bias):
    agg = jnp.einsum("bnm,bmd->bnd", A, features)
    cat = jnp.concatenate([features, agg], axis=2)
    out = jnp.einsum("bnd,df->bnf", cat, weight)
    return jax.nn.relu(out + bias)


if __name__ == "__main__":
    # Small shapes consistent with the module's forward (GraphConv layer).
    B, N, IN_DIM, OUT_DIM = 2, 8, 4, 16

    key = jax.random.PRNGKey(0)
    k_feat, k_adj, k_w = jax.random.split(key, 3)

    features = jax.random.normal(k_feat, (B, N, IN_DIM), dtype=jnp.float32)

    # Row-normalized random adjacency (MeanAggregator-style).
    adj_raw = jax.random.uniform(k_adj, (B, N, N), dtype=jnp.float32)
    A = adj_raw / jnp.sum(adj_raw, axis=2, keepdims=True)

    # Deterministic xavier_uniform for weight (2*in_dim, out_dim), zeros bias.
    fan_in, fan_out = 2 * IN_DIM, OUT_DIM
    bound = (6.0 / (fan_in + fan_out)) ** 0.5
    weight = jax.random.uniform(
        k_w, (2 * IN_DIM, OUT_DIM), dtype=jnp.float32, minval=-bound, maxval=bound)
    bias = jnp.zeros((OUT_DIM,), dtype=jnp.float32)

    out = graph_conv(features, A, weight, bias)
    out = jax.block_until_ready(out)

    ref = reference(features, A, weight, bias)
    assert out.shape == (B, N, OUT_DIM)
    assert jnp.allclose(out, ref, atol=1e-5, rtol=1e-5), float(
        jnp.max(jnp.abs(out - ref)))

    print("KERNEL_OK")
</pallas_src>

<mosaic_0001>
module attributes {stable_mosaic.version = 11 : i64} {
  func.func @_graph_conv_kernel(%arg0: i32, %arg1: memref<1x8x4xf32, #tpu.memory_space<vmem>>, %arg2: memref<1x8x8xf32, #tpu.memory_space<vmem>>, %arg3: memref<4x16xf32, #tpu.memory_space<vmem>>, %arg4: memref<4x16xf32, #tpu.memory_space<vmem>>, %arg5: memref<1x16xf32, #tpu.memory_space<vmem>>, %arg6: memref<1x8x16xf32, #tpu.memory_space<vmem>>) attributes {dimension_semantics = [#tpu.dimension_semantics<parallel>], iteration_bounds = array<i64: 2>, scalar_prefetch = 0 : i64, scratch_operands = 0 : i64, tpu.core_type = #tpu.core_type<tc>, window_params = [{transform_indices = @transform_0, window_bounds = array<i64: 1, 8, 4>}, {transform_indices = @transform_1, window_bounds = array<i64: 1, 8, 8>}, {pipeline_mode = #tpu.pipeline_mode<synchronous>, transform_indices = @transform_2, window_bounds = array<i64: 4, 16>}, {pipeline_mode = #tpu.pipeline_mode<synchronous>, transform_indices = @transform_3, window_bounds = array<i64: 4, 16>}, {pipeline_mode = #tpu.pipeline_mode<synchronous>, transform_indices = @transform_4, window_bounds = array<i64: 1, 16>}, {transform_indices = @transform_5, window_bounds = array<i64: 1, 8, 16>}]} {
    %c0 = arith.constant 0 : index
    %c0_0 = arith.constant 0 : index
    %c0_1 = arith.constant 0 : index
    %0 = vector.load %arg1[%c0, %c0_0, %c0_1] : memref<1x8x4xf32, #tpu.memory_space<vmem>>, vector<1x8x4xf32>
    %c0_2 = arith.constant 0 : index
    %c0_3 = arith.constant 0 : index
    %c0_4 = arith.constant 0 : index
    %1 = vector.load %arg2[%c0_2, %c0_3, %c0_4] : memref<1x8x8xf32, #tpu.memory_space<vmem>>, vector<1x8x8xf32>
    %c0_5 = arith.constant 0 : index
    %c0_6 = arith.constant 0 : index
    %2 = vector.load %arg3[%c0_5, %c0_6] : memref<4x16xf32, #tpu.memory_space<vmem>>, vector<4x16xf32>
    %c0_7 = arith.constant 0 : index
    %c0_8 = arith.constant 0 : index
    %3 = vector.load %arg4[%c0_7, %c0_8] : memref<4x16xf32, #tpu.memory_space<vmem>>, vector<4x16xf32>
    %4 = vector.shape_cast %0 : vector<1x8x4xf32> to vector<8x4xf32>
    %cst = arith.constant dense<0.000000e+00> : vector<8x16xf32>
    %5 = tpu.matmul %4, %2, %cst {dimension_numbers = #tpu.dot_dimension_numbers<[1], [0], [0], [1], [0, 0, 1, 1], [], []>} : vector<8x4xf32>, vector<4x16xf32>, vector<8x16xf32> -> vector<8x16xf32>
    %cst_9 = arith.constant dense<0.000000e+00> : vector<8x16xf32>
    %6 = tpu.matmul %4, %3, %cst_9 {dimension_numbers = #tpu.dot_dimension_numbers<[1], [0], [0], [1], [0, 0, 1, 1], [], []>} : vector<8x4xf32>, vector<4x16xf32>, vector<8x16xf32> -> vector<8x16xf32>
    %7 = vector.shape_cast %6 : vector<8x16xf32> to vector<1x8x16xf32>
    "tpu.trace_start"() <{level = 10 : i32, message = "bnm,bmf->bnf"}> : () -> ()
    %cst_10 = arith.constant dense<0.000000e+00> : vector<1x8x16xf32>
    %8 = tpu.matmul %1, %7, %cst_10 {dimension_numbers = #tpu.dot_dimension_numbers<[2], [1], [1], [2], [0, 0, 0, 1, 1, 2], [0], [0]>} : vector<1x8x8xf32>, vector<1x8x16xf32>, vector<1x8x16xf32> -> vector<1x8x16xf32>
    "tpu.trace_stop"() : () -> ()
    %9 = vector.shape_cast %8 : vector<1x8x16xf32> to vector<8x16xf32>
    %10 = arith.addf %5, %9 : vector<8x16xf32>
    %c0_11 = arith.constant 0 : index
    %c0_12 = arith.constant 0 : index
    %11 = vector.load %arg5[%c0_11, %c0_12] : memref<1x16xf32, #tpu.memory_space<vmem>>, vector<1x16xf32>
    %12 = vector.broadcast %11 : vector<1x16xf32> to vector<8x16xf32>
    %13 = arith.addf %10, %12 : vector<8x16xf32>
    %cst_13 = arith.constant 0.000000e+00 : f32
    %14 = vector.broadcast %cst_13 : f32 to vector<8x16xf32>
    %15 = arith.maximumf %13, %14 : vector<8x16xf32>
    %16 = vector.shape_cast %15 : vector<8x16xf32> to vector<1x8x16xf32>
    %c0_14 = arith.constant 0 : index
    %c0_15 = arith.constant 0 : index
    %c0_16 = arith.constant 0 : index
    %17 = vector.load %arg6[%c0_14, %c0_15, %c0_16] : memref<1x8x16xf32, #tpu.memory_space<vmem>>, vector<1x8x16xf32>
    tpu.vector_store %arg6[%c0_14, %c0_15, %c0_16], %16 {strides = array<i32>} : memref<1x8x16xf32, #tpu.memory_space<vmem>>, vector<1x8x16xf32>,
    return
  }
  func.func @transform_0(%arg0: i32) -> (i32, i32, i32) {
    %c0_i32 = arith.constant 0 : i32
    %c0_i32_0 = arith.constant 0 : i32
    %c0_i32_1 = arith.constant 0 : i32
    return %arg0, %c0_i32, %c0_i32_0 : i32, i32, i32
  }
  func.func @transform_1(%arg0: i32) -> (i32, i32, i32) {
    %c0_i32 = arith.constant 0 : i32
    %c0_i32_0 = arith.constant 0 : i32
    %c0_i32_1 = arith.constant 0 : i32
    return %arg0, %c0_i32, %c0_i32_0 : i32, i32, i32
  }
  func.func @transform_2(%arg0: i32) -> (i32, i32) {
    %c0_i32 = arith.constant 0 : i32
    %c0_i32_0 = arith.constant 0 : i32
    %c0_i32_1 = arith.constant 0 : i32
    return %c0_i32, %c0_i32_0 : i32, i32
  }
  func.func @transform_3(%arg0: i32) -> (i32, i32) {
    %c0_i32 = arith.constant 0 : i32
    %c0_i32_0 = arith.constant 0 : i32
    %c0_i32_1 = arith.constant 0 : i32
    return %c0_i32, %c0_i32_0 : i32, i32
  }
  func.func @transform_4(%arg0: i32) -> (i32, i32) {
    %c0_i32 = arith.constant 0 : i32
    %c0_i32_0 = arith.constant 0 : i32
    %c0_i32_1 = arith.constant 0 : i32
    return %c0_i32, %c0_i32_0 : i32, i32
  }
  func.func @transform_5(%arg0: i32) -> (i32, i32, i32) {
    %c0_i32 = arith.constant 0 : i32
    %c0_i32_0 = arith.constant 0 : i32
    %c0_i32_1 = arith.constant 0 : i32
    return %arg0, %c0_i32, %c0_i32_0 : i32, i32, i32
  }
}

</mosaic_0001>

<llo_original>
// kernel: tpu_custom_call.1
$region0: #{tpu_custom_call.1}
  #allocation0 [shape = 'u32[]', space=smem, size = 0x4, offset = 0x4, fixed_abs, tag = 'smem constant byte address 0x4 - core index']
  #allocation1 [shape = 'u32[144,128]{1,0:T(1,128)}', space=vmem, size = 0x12000, scoped, tag = 'internal scratch']
  %s0 = inlined_call_operand.vmem [shape: f32[2,8,4], index: 0, kind: input, shape index: {}]
  %s1 = inlined_call_operand.vmem [shape: f32[2,8,8], index: 1, kind: input, shape index: {}]
  %s2 = inlined_call_operand.vmem [shape: f32[4,16], index: 2, kind: input, shape index: {}]
  %s3 = inlined_call_operand.vmem [shape: f32[4,16], index: 3, kind: input, shape index: {}]
  %s4 = inlined_call_operand.vmem [shape: f32[1,16], index: 4, kind: input, shape index: {}]
  %s5 = inlined_call_operand.hbm [shape: f32[2,8,16], index: 5, kind: output, shape index: {}]
  %s6 = sld [smem:[#allocation0]]
  $region53: #{tpu_custom_call.1} parent=0
    _
  %s8 = ssub.s32 1, %s6
  %s9 = scalar_select 0, %s8, %s6
  $region1: #{tpu_custom_call.1} parent=0
    #allocation2 [shape = 'u8[8192]{0}', space=vmem, size = 0x2000, scoped, tag = 'output window, operand 0']
    #allocation3 [shape = 's32[2]{0}', space=sflag, size = 0x8, scoped, tag = 'scoped memory for tpu_custom_call.1']
    %10 = vsyncpa [#allocation3], 0
    %s11 = scalar_lea.sflag [#allocation3], 1
    %12 = vsyncpa %s11, 0
    loop: start=0, step=1, limit=4
    $region2: #{tpu_custom_call.1} parent=1 // loop_pre_header
      _
    $region3: #{tpu_custom_call.1} parent=1 // loop_header
      %s14 = sphi 0, %s18
      %p15 = scmp.ge.s32.totalorder %s14, 4
      %s24 = sphi 0, %s26
      %s27 = sphi 0, %s24
      %s28 = sphi 0, %s27
      %s44 = sphi 0, %s28
      %s50 = sphi 0, %s52
      %s53 = sphi 0, %s50
      %s54 = sphi 0, %s53
      %s70 = sphi 0, %s54
      %s74 = sphi 0, %s74
      %s76 = sphi 0, %s74
      %s77 = sphi 0, %s76
      %s91 = sphi 0, %s77
      %s95 = sphi 0, %s95
      %s97 = sphi 0, %s95
      %s98 = sphi 0, %s97
      %s112 = sphi 0, %s98
      %s116 = sphi 0, %s116
      %s118 = sphi 0, %s116
      %s119 = sphi 0, %s118
      %s133 = sphi 0, %s119
      %s139 = sphi 0, %s141
      %s142 = sphi 0, %s139
      %s143 = sphi 0, %s142
      %s159 = sphi 0, %s143
    $region4: #{tpu_custom_call.1} parent=1 // loop_header_branch
      %17 = sbr.rel (%p15) target = $region8
    $region5: #{tpu_custom_call.1} parent=1 // loop_body
      %s19 = ssub.s32 %s14, 1
      %s20 = ssub.s32 %s14, 2
      %s21 = sadd.s32 %s14, 1
      %s22 = ssub.s32 %s14, %s21
      %p23 = scmp.eq.s32.totalorder %s22, 0
      %s25 = sadd.s32 %s24, 1
      %s26 = scalar_select %p23, %s24, %s25
      %p29 = pneg %p23
      %p30 = scmp.eq.s32.totalorder %s14, 1
      %p31 = por %p29, %p30
      %p32 = scmp.ne.s32.totalorder %s24, %s27
      %p33 = scmp.eq.s32.totalorder %s14, 0
      %p34 = por %p32, %p33
      %p35 = scmp.ne.s32.totalorder %s24, %s27
      %p36 = scmp.eq.s32.totalorder %s19, 1
      %p37 = por %p35, %p36
      %p38 = scmp.ne.s32.totalorder %s27, %s28
      %p39 = scmp.eq.s32.totalorder %s19, 0
      %p40 = por %p38, %p39
      %p41 = scmp.ne.s32.totalorder %s27, %s28
      %p42 = scmp.eq.s32.totalorder %s20, 1
      %p43 = por %p41, %p42
      %p45 = scmp.ne.s32.totalorder %s28, %s44
      %p46 = scmp.eq.s32.totalorder %s20, 0
      %p47 = por %p45, %p46
      %s48 = ssub.s32 %s14, %s21
      %p49 = scmp.eq.s32.totalorder %s48, 0
      %s51 = sadd.s32 %s50, 1
      %s52 = scalar_select %p49, %s50, %s51
      %p55 = pneg %p49
      %p56 = scmp.eq.s32.totalorder %s14, 1
      %p57 = por %p55, %p56
      %p58 = scmp.ne.s32.totalorder %s50, %s53
      %p59 = scmp.eq.s32.totalorder %s14, 0
      %p60 = por %p58, %p59
      %p61 = scmp.ne.s32.totalorder %s50, %s53
      %p62 = scmp.eq.s32.totalorder %s19, 1
      %p63 = por %p61, %p62
      %p64 = scmp.ne.s32.totalorder %s53, %s54
      %p65 = scmp.eq.s32.totalorder %s19, 0
      %p66 = por %p64, %p65
      %p67 = scmp.ne.s32.totalorder %s53, %s54
      %p68 = scmp.eq.s32.totalorder %s20, 1
      %p69 = por %p67, %p68
      %p71 = scmp.ne.s32.totalorder %s54, %s70
      %p72 = scmp.eq.s32.totalorder %s20, 0
      %p73 = por %p71, %p72
      %s75 = sadd.s32 %s74, 1
      %p78 = scmp.eq.s32.totalorder %s14, 1
      %p79 = scmp.ne.s32.totalorder %s74, %s76
      %p80 = scmp.eq.s32.totalorder %s14, 0
      %p81 = por %p79, %p80
      %p82 = scmp.ne.s32.totalorder %s74, %s76
      %p83 = scmp.eq.s32.totalorder %s19, 1
      %p84 = por %p82, %p83
      %p85 = scmp.ne.s32.totalorder %s76, %s77
      %p86 = scmp.eq.s32.totalorder %s19, 0
      %p87 = por %p85, %p86
      %p88 = scmp.ne.s32.totalorder %s76, %s77
      %p89 = scmp.eq.s32.totalorder %s20, 1
      %p90 = por %p88, %p89
      %p92 = scmp.ne.s32.totalorder %s77, %s91
      %p93 = scmp.eq.s32.totalorder %s20, 0
      %p94 = por %p92, %p93
      %s96 = sadd.s32 %s95, 1
      %p99 = scmp.eq.s32.totalorder %s14, 1
      %p100 = scmp.ne.s32.totalorder %s95, %s97
      %p101 = scmp.eq.s32.totalorder %s14, 0
      %p102 = por %p100, %p101
      %p103 = scmp.ne.s32.totalorder %s95, %s97
      %p104 = scmp.eq.s32.totalorder %s19, 1
      %p105 = por %p103, %p104
      %p106 = scmp.ne.s32.totalorder %s97, %s98
      %p107 = scmp.eq.s32.totalorder %s19, 0
      %p108 = por %p106, %p107
      %p109 = scmp.ne.s32.totalorder %s97, %s98
      %p110 = scmp.eq.s32.totalorder %s20, 1
      %p111 = por %p109, %p110
      %p113 = scmp.ne.s32.totalorder %s98, %s112
      %p114 = scmp.eq.s32.totalorder %s20, 0
      %p115 = por %p113, %p114
      %s117 = sadd.s32 %s116, 1
      %p120 = scmp.eq.s32.totalorder %s14, 1
      %p121 = scmp.ne.s32.totalorder %s116, %s118
      %p122 = scmp.eq.s32.totalorder %s14, 0
      %p123 = por %p121, %p122
      %p124 = scmp.ne.s32.totalorder %s116, %s118
      %p125 = scmp.eq.s32.totalorder %s19, 1
      %p126 = por %p124, %p125
      %p127 = scmp.ne.s32.totalorder %s118, %s119
      %p128 = scmp.eq.s32.totalorder %s19, 0
      %p129 = por %p127, %p128
      %p130 = scmp.ne.s32.totalorder %s118, %s119
      %p131 = scmp.eq.s32.totalorder %s20, 1
      %p132 = por %p130, %p131
      %p134 = scmp.ne.s32.totalorder %s119, %s133
      %p135 = scmp.eq.s32.totalorder %s20, 0
      %p136 = por %p134, %p135
      %s137 = ssub.s32 %s14, %s21
      %p138 = scmp.eq.s32.totalorder %s137, 0
      %s140 = sadd.s32 %s139, 1
      %s141 = scalar_select %p138, %s139, %s140
      %p144 = pneg %p138
      %p145 = scmp.eq.s32.totalorder %s14, 1
      %p146 = por %p144, %p145
      %p147 = scmp.ne.s32.totalorder %s139, %s142
      %p148 = scmp.eq.s32.totalorder %s14, 0
      %p149 = por %p147, %p148
      %p150 = scmp.ne.s32.totalorder %s139, %s142
      %p151 = scmp.eq.s32.totalorder %s19, 1
      %p152 = por %p150, %p151
      %p153 = scmp.ne.s32.totalorder %s142, %s143
      %p154 = scmp.eq.s32.totalorder %s19, 0
      %p155 = por %p153, %p154
      %p156 = scmp.ne.s32.totalorder %s142, %s143
      %p157 = scmp.eq.s32.totalorder %s20, 1
      %p158 = por %p156, %p157
      %p160 = scmp.ne.s32.totalorder %s143, %s159
      %p161 = scmp.eq.s32.totalorder %s20, 0
      %p162 = por %p160, %p161
      %p163 = scmp.le.s32.totalorder 1, %s14
      %p164 = scmp.lt.s32.totalorder %s14, 3
      %p165 = pnand %p163, %p164
      %p166 = pneg %p165
      // Predicated region
      $region9: #{tpu_custom_call.1} parent=5 // pred_check
        _
      $region10: #{tpu_custom_call.1} parent=5 // pred_check_branch
        %168 = sbr.rel (%p165) target = $region12
      $region11: #{tpu_custom_call.1} parent=5 // pred_region
        %s169 = ssub.s32 %s14, 1
        // Predicated region
        $region13: #{tpu_custom_call.1} parent=11 // pred_check
          %p170 = pneg %p87
        $region14: #{tpu_custom_call.1} parent=11 // pred_check_branch
          %172 = sbr.rel (%p170) target = $region16
        $region15: #{tpu_custom_call.1} parent=11 // pred_region
          _
        $region16: #{tpu_custom_call.1} parent=11 // pred_fallthru
          _
        // Predicated region
        $region17: #{tpu_custom_call.1} parent=11 // pred_check
          %p173 = pneg %p108
        $region18: #{tpu_custom_call.1} parent=11 // pred_check_branch
          %175 = sbr.rel (%p173) target = $region20
        $region19: #{tpu_custom_call.1} parent=11 // pred_region
          _
        $region20: #{tpu_custom_call.1} parent=11 // pred_fallthru
          _
        // Predicated region
        $region21: #{tpu_custom_call.1} parent=11 // pred_check
          %p176 = pneg %p129
        $region22: #{tpu_custom_call.1} parent=11 // pred_check_branch
          %178 = sbr.rel (%p176) target = $region24
        $region23: #{tpu_custom_call.1} parent=11 // pred_region
          _
        $region24: #{tpu_custom_call.1} parent=11 // pred_fallthru
          _
      $region12: #{tpu_custom_call.1} parent=5 // pred_fallthru
        _
      %p179 = scmp.lt.s32.totalorder %s14, 2
      // Predicated region
      $region25: #{tpu_custom_call.1} parent=5 // pred_check
        %p180 = pneg %p179
      $region26: #{tpu_custom_call.1} parent=5 // pred_check_branch
        %182 = sbr.rel (%p180) target = $region28
      $region27: #{tpu_custom_call.1} parent=5 // pred_region
        // Predicated region
        $region29: #{tpu_custom_call.1} parent=27 // pred_check
          %p183 = pneg %p34
        $region30: #{tpu_custom_call.1} parent=27 // pred_check_branch
          %185 = sbr.rel (%p183) target = $region32
        $region31: #{tpu_custom_call.1} parent=27 // pred_region
          %p186 = scmp.lt.s32.totalorder %s14, 1
          %s187 = scalar_select %p186, %s14, 1
          %s188 = smul.addr %s187, 8
          %s189 = scalar_lea.vmem %s0, %s188
        $region32: #{tpu_custom_call.1} parent=27 // pred_fallthru
          _
        // Predicated region
        $region33: #{tpu_custom_call.1} parent=27 // pred_check
          %p190 = pneg %p60
        $region34: #{tpu_custom_call.1} parent=27 // pred_check_branch
          %192 = sbr.rel (%p190) target = $region36
        $region35: #{tpu_custom_call.1} parent=27 // pred_region
          %p193 = scmp.lt.s32.totalorder %s14, 1
          %s194 = scalar_select %p193, %s14, 1
          %s195 = smul.addr %s194, 8
          %s196 = scalar_lea.vmem %s1, %s195
        $region36: #{tpu_custom_call.1} parent=27 // pred_fallthru
          _
      $region28: #{tpu_custom_call.1} parent=5 // pred_fallthru
        _
      %p197 = scmp.le.s32.totalorder 1, %s14
      %p198 = scmp.lt.s32.totalorder %s14, 3
      %p199 = pnand %p197, %p198
      %p200 = pneg %p199
      // Predicated region
      $region37: #{tpu_custom_call.1} parent=5 // pred_check
        _
      $region38: #{tpu_custom_call.1} parent=5 // pred_check_branch
        %202 = sbr.rel (%p199) target = $region40
      $region39: #{tpu_custom_call.1} parent=5 // pred_region
        %s203 = ssub.s32 %s14, 1
        %p204 = scmp.lt.s32.totalorder %s19, 1
        %s205 = scalar_select %p204, %s19, 1
        %s206 = smul.addr %s205, 8
        %s207 = scalar_lea.vmem %s0, %s206
        %p208 = pneg %p40
        %p209 = pneg %p37
        %p210 = scmp.lt.s32.totalorder %s19, 1
        %s211 = scalar_select %p210, %s19, 1
        %s212 = smul.addr %s211, 8
        %s213 = scalar_lea.vmem %s1, %s212
        %p214 = pneg %p66
        %p215 = pneg %p63
        %p216 = pneg %p87
        %p217 = pneg %p84
        %p218 = pneg %p108
        %p219 = pneg %p105
        %p220 = pneg %p129
        %p221 = pneg %p126
        %p222 = pneg %p155
        %p223 = pneg %p152
        %s224 = sand.u32 %s142, 1
        %s225 = scalar_lea.sflag [#allocation3], %s224
        %s226 = sand.u32 %s142, 1
        %s227 = smul.addr %s226, 8
        %s228 = scalar_lea.vmem [#allocation2], %s227
        %p229 = scmp.lt.s32.totalorder %s19, 1
        %s230 = scalar_select %p229, %s19, 1
        %s231 = smul.addr %s230, 8
        %s232 = scalar_lea.vmem %s0, %s231
        %p233 = scmp.lt.s32.totalorder %s19, 1
        %s234 = scalar_select %p233, %s19, 1
        %s235 = smul.addr %s234, 8
        %s236 = scalar_lea.vmem %s1, %s235
        %v237 = vld [vmem:[%s232] sm:$0xff]
        %v238 = vld [vmem:[%s236] sm:$0xff]
        %v239 = vld [vmem:[%s2] sm:$0xf]
        %v240 = vld [vmem:[%s3] sm:$0xf]
        %vm241 = vcmask 31744
        %v243 = vsel %vm241, %v237, 0
        %vm245 = vcmask 1043456
        %v247 = vsel %vm245, %v240, 0
        %249 = vmatprep.subr.mxu0 0.0
        %250 = vmatpush1.msra.mxu0 %v247
        %251 = vmatprep.subr.mxu0 0.0
        %252 = vmatpush1.msra.mxu0 0.0
        %253 = vmatprep.subr.mxu0 0.0
        %254 = vmatpush1.msra.mxu0 0.0
        %255 = vmatprep.subr.mxu0 0.0
        %256 = vmatpush1.msra.mxu0 0.0
        %257 = vmatprep.subr.mxu0 0.0
        %258 = vmatpush1.msra.mxu0 0.0
        %259 = vmatprep.subr.mxu0 0.0
        %260 = vmatpush1.msra.mxu0 0.0
        %261 = vmatprep.subr.mxu0 0.0
        %262 = vmatpush1.msra.mxu0 0.0
        %263 = vmatprep.subr.mxu0 0.0
        %264 = vmatpush1.msra.mxu0 0.0
        %265 = vmatprep.subr.mxu0 0.0
        %266 = vmatpush1.msra.mxu0 0.0
        %267 = vmatprep.subr.mxu0 0.0
        %268 = vmatpush1.msra.mxu0 0.0
        %269 = vmatprep.subr.mxu0 0.0
        %270 = vmatpush1.msra.mxu0 0.0
        %271 = vmatprep.subr.mxu0 0.0
        %272 = vmatpush1.msra.mxu0 0.0
        %273 = vmatprep.subr.mxu0 0.0
        %274 = vmatpush1.msra.mxu0 0.0
        %275 = vmatprep.subr.mxu0 0.0
        %276 = vmatpush1.msra.mxu0 0.0
        %277 = vmatprep.subr.mxu0 0.0
        %278 = vmatpush1.msra.mxu0 0.0
        %279 = vmatprep.subr.mxu0 0.0
        %280 = vmatpush1.msra.mxu0 0.0
        %281 = vmatprep.subr.mxu0 0.0
        %282 = vmatpush1.msra.mxu0 0.0
        %283 = vmatprep.subr.mxu0 0.0
        %284 = vmatpush1.msra.mxu0 0.0
        %285 = vmatprep.subr.mxu0 0.0
        %286 = vmatpush1.msra.mxu0 0.0
        %287 = vmatprep.subr.mxu0 0.0
        %288 = vmatpush1.msra.mxu0 0.0
        %289 = vmatprep.subr.mxu0 0.0
        %290 = vmatpush1.msra.mxu0 0.0
        %291 = vmatprep.subr.mxu0 0.0
        %292 = vmatpush1.msra.mxu0 0.0
        %293 = vmatprep.subr.mxu0 0.0
        %294 = vmatpush1.msra.mxu0 0.0
        %295 = vmatprep.subr.mxu0 0.0
        %296 = vmatpush1.msra.mxu0 0.0
        %297 = vmatprep.subr.mxu0 0.0
        %298 = vmatpush1.msra.mxu0 0.0
        %299 = vmatprep.subr.mxu0 0.0
        %300 = vmatpush1.msra.mxu0 0.0
        %301 = vmatprep.subr.mxu0 0.0
        %302 = vmatpush1.msra.mxu0 0.0
        %303 = vmatprep.subr.mxu0 0.0
        %304 = vmatpush1.msra.mxu0 0.0
        %305 = vmatprep.subr.mxu0 0.0
        %306 = vmatpush1.msra.mxu0 0.0
        %307 = vmatprep.subr.mxu0 0.0
        %308 = vmatpush1.msra.mxu0 0.0
        %309 = vmatprep.subr.mxu0 0.0
        %310 = vmatpush1.msra.mxu0 0.0
        %311 = vmatprep.subr.mxu0 0.0
        %312 = vmatpush1.msra.mxu0 0.0
        %313 = vmatprep.mubr.f32.mxu0 0.0
        %314 = vmatmul.mubr.f32.gmra.mrb[0].mxu0 %v243
        %v315 = vpop.f32.mrb[0].mxu0
        %v316 = vadd.f32 0.0, %v315
        %v317 = vpop.f32.mrb[0].mxu0
        %318 = vdwg.mxu0
        %vm319 = vcmask 64512
        %v321 = vsel %vm319, %v238, 0
        %323 = vmatprep.subr.mxu0 0.0
        %324 = vmatpush1.msra.mxu0 %v316
        %325 = vmatprep.subr.mxu0 0.0
        %326 = vmatpush1.msra.mxu0 0.0
        %327 = vmatprep.subr.mxu0 0.0
        %328 = vmatpush1.msra.mxu0 0.0
        %329 = vmatprep.subr.mxu0 0.0
        %330 = vmatpush1.msra.mxu0 0.0
        %331 = vmatprep.subr.mxu0 0.0
        %332 = vmatpush1.msra.mxu0 0.0
        %333 = vmatprep.subr.mxu0 0.0
        %334 = vmatpush1.msra.mxu0 0.0
        %335 = vmatprep.subr.mxu0 0.0
        %336 = vmatpush1.msra.mxu0 0.0
        %337 = vmatprep.subr.mxu0 0.0
        %338 = vmatpush1.msra.mxu0 0.0
        %339 = vmatprep.subr.mxu0 0.0
        %340 = vmatpush1.msra.mxu0 0.0
        %341 = vmatprep.subr.mxu0 0.0
        %342 = vmatpush1.msra.mxu0 0.0
        %343 = vmatprep.subr.mxu0 0.0
        %344 = vmatpush1.msra.mxu0 0.0
        %345 = vmatprep.subr.mxu0 0.0
        %346 = vmatpush1.msra.mxu0 0.0
        %347 = vmatprep.subr.mxu0 0.0
        %348 = vmatpush1.msra.mxu0 0.0
        %349 = vmatprep.subr.mxu0 0.0
        %350 = vmatpush1.msra.mxu0 0.0
        %351 = vmatprep.subr.mxu0 0.0
        %352 = vmatpush1.msra.mxu0 0.0
        %353 = vmatprep.subr.mxu0 0.0
        %354 = vmatpush1.msra.mxu0 0.0
        %355 = vmatprep.subr.mxu0 0.0
        %356 = vmatpush1.msra.mxu0 0.0
        %357 = vmatprep.subr.mxu0 0.0
        %358 = vmatpush1.msra.mxu0 0.0
        %359 = vmatprep.subr.mxu0 0.0
        %360 = vmatpush1.msra.mxu0 0.0
        %361 = vmatprep.subr.mxu0 0.0
        %362 = vmatpush1.msra.mxu0 0.0
        %363 = vmatprep.subr.mxu0 0.0
        %364 = vmatpush1.msra.mxu0 0.0
        %365 = vmatprep.subr.mxu0 0.0
        %366 = vmatpush1.msra.mxu0 0.0
        %367 = vmatprep.subr.mxu0 0.0
        %368 = vmatpush1.msra.mxu0 0.0
        %369 = vmatprep.subr.mxu0 0.0
        %370 = vmatpush1.msra.mxu0 0.0
        %371 = vmatprep.subr.mxu0 0.0
        %372 = vmatpush1.msra.mxu0 0.0
        %373 = vmatprep.subr.mxu0 0.0
        %374 = vmatpush1.msra.mxu0 0.0
        %375 = vmatprep.subr.mxu0 0.0
        %376 = vmatpush1.msra.mxu0 0.0
        %377 = vmatprep.subr.mxu0 0.0
        %378 = vmatpush1.msra.mxu0 0.0
        %379 = vmatprep.subr.mxu0 0.0
        %380 = vmatpush1.msra.mxu0 0.0
        %381 = vmatprep.subr.mxu0 0.0
        %382 = vmatpush1.msra.mxu0 0.0
        %383 = vmatprep.subr.mxu0 0.0
        %384 = vmatpush1.msra.mxu0 0.0
        %385 = vmatprep.subr.mxu0 0.0
        %386 = vmatpush1.msra.mxu0 0.0
        %387 = vmatprep.mubr.f32.mxu0 0.0
        %388 = vmatmul.mubr.f32.gmra.mrb[0].mxu0 %v321
        %v389 = vpop.f32.mrb[0].mxu0
        %v390 = vadd.f32 0.0, %v389
        %v391 = vpop.f32.mrb[0].mxu0
        %392 = vdwg.mxu0
        %v394 = vsel %vm245, %v239, 0
        %396 = vmatprep.subr.mxu0 0.0
        %397 = vmatpush1.msra.mxu0 %v394
        %398 = vmatprep.subr.mxu0 0.0
        %399 = vmatpush1.msra.mxu0 0.0
        %400 = vmatprep.subr.mxu0 0.0
        %401 = vmatpush1.msra.mxu0 0.0
        %402 = vmatprep.subr.mxu0 0.0
        %403 = vmatpush1.msra.mxu0 0.0
        %404 = vmatprep.subr.mxu0 0.0
        %405 = vmatpush1.msra.mxu0 0.0
        %406 = vmatprep.subr.mxu0 0.0
        %407 = vmatpush1.msra.mxu0 0.0
        %408 = vmatprep.subr.mxu0 0.0
        %409 = vmatpush1.msra.mxu0 0.0
        %410 = vmatprep.subr.mxu0 0.0
        %411 = vmatpush1.msra.mxu0 0.0
        %412 = vmatprep.subr.mxu0 0.0
        %413 = vmatpush1.msra.mxu0 0.0
        %414 = vmatprep.subr.mxu0 0.0
        %415 = vmatpush1.msra.mxu0 0.0
        %416 = vmatprep.subr.mxu0 0.0
        %417 = vmatpush1.msra.mxu0 0.0
        %418 = vmatprep.subr.mxu0 0.0
        %419 = vmatpush1.msra.mxu0 0.0
        %420 = vmatprep.subr.mxu0 0.0
        %421 = vmatpush1.msra.mxu0 0.0
        %422 = vmatprep.subr.mxu0 0.0
        %423 = vmatpush1.msra.mxu0 0.0
        %424 = vmatprep.subr.mxu0 0.0
        %425 = vmatpush1.msra.mxu0 0.0
        %426 = vmatprep.subr.mxu0 0.0
        %427 = vmatpush1.msra.mxu0 0.0
        %428 = vmatprep.subr.mxu0 0.0
        %429 = vmatpush1.msra.mxu0 0.0
        %430 = vmatprep.subr.mxu0 0.0
        %431 = vmatpush1.msra.mxu0 0.0
        %432 = vmatprep.subr.mxu0 0.0
        %433 = vmatpush1.msra.mxu0 0.0
        %434 = vmatprep.subr.mxu0 0.0
        %435 = vmatpush1.msra.mxu0 0.0
        %436 = vmatprep.subr.mxu0 0.0
        %437 = vmatpush1.msra.mxu0 0.0
        %438 = vmatprep.subr.mxu0 0.0
        %439 = vmatpush1.msra.mxu0 0.0
        %440 = vmatprep.subr.mxu0 0.0
        %441 = vmatpush1.msra.mxu0 0.0
        %442 = vmatprep.subr.mxu0 0.0
        %443 = vmatpush1.msra.mxu0 0.0
        %444 = vmatprep.subr.mxu0 0.0
        %445 = vmatpush1.msra.mxu0 0.0
        %446 = vmatprep.subr.mxu0 0.0
        %447 = vmatpush1.msra.mxu0 0.0
        %448 = vmatprep.subr.mxu0 0.0
        %449 = vmatpush1.msra.mxu0 0.0
        %450 = vmatprep.subr.mxu0 0.0
        %451 = vmatpush1.msra.mxu0 0.0
        %452 = vmatprep.subr.mxu0 0.0
        %453 = vmatpush1.msra.mxu0 0.0
        %454 = vmatprep.subr.mxu0 0.0
        %455 = vmatpush1.msra.mxu0 0.0
        %456 = vmatprep.subr.mxu0 0.0
        %457 = vmatpush1.msra.mxu0 0.0
        %458 = vmatprep.subr.mxu0 0.0
        %459 = vmatpush1.msra.mxu0 0.0
        %460 = vmatprep.mubr.f32.mxu0 0.0
        %461 = vmatmul.mubr.f32.gmra.mrb[0].mxu0 %v243
        %v462 = vpop.f32.mrb[0].mxu0
        %v463 = vadd.f32 %v390, %v462
        %v464 = vpop.f32.mrb[0].mxu0
        %465 = vdwg.mxu0
        %v466 = vld [vmem:[%s4] sm:$0x1]
        %v468 = vlaneseq
        %v469 = vshrl.u32 %v468, 7
        %v470 = vsub.s32 0, %v469
        %v471 = vrot.slane %v466, %v470
        %v473 = vadd.f32 %v463, %v471
        %v474 = vmax.f32 %v473, 0.0
        %vm475 = vcmask 130048
        %476 = vst.msk [vmem:[%s228] sm:$0xff] %vm475, %v474
        %s477 = sand.u32 %s142, 1
        %s478 = scalar_lea.sflag [#allocation3], %s477
        %s479 = sand.u32 %s142, 1
        %s480 = smul.addr %s479, 8
        %s481 = scalar_lea.vmem [#allocation2], %s480
        // Predicated region
        $region41: #{tpu_custom_call.1} parent=39 // pred_check
          %p482 = pneg %p152
        $region42: #{tpu_custom_call.1} parent=39 // pred_check_branch
          %484 = sbr.rel (%p482) target = $region44
        $region43: #{tpu_custom_call.1} parent=39 // pred_region
          %s486 = ssub.s32 128, 128
          %487 = vsyncadd %s478, %s486
          %s488 = smul.addr %s19, 128
          %s489 = scalar_lea.hbm %s5, %s488
          %s491 = sshll.u32 %s481, 4
          %s492 = int_to_ptr.vmem [resolvable:$true] %s491
          %494 = dma.vmem_to_hbm [thread:$0]  %s492, 128, %s489, %s478
        $region44: #{tpu_custom_call.1} parent=39 // pred_fallthru
          _
      $region40: #{tpu_custom_call.1} parent=5 // pred_fallthru
        _
      %p495 = scmp.le.s32.totalorder 2, %s14
      // Predicated region
      $region45: #{tpu_custom_call.1} parent=5 // pred_check
        %p496 = pneg %p495
      $region46: #{tpu_custom_call.1} parent=5 // pred_check_branch
        %498 = sbr.rel (%p496) target = $region48
      $region47: #{tpu_custom_call.1} parent=5 // pred_region
        %s499 = ssub.s32 %s14, 2
        // Predicated region
        $region49: #{tpu_custom_call.1} parent=47 // pred_check
          %p500 = pneg %p158
        $region50: #{tpu_custom_call.1} parent=47 // pred_check_branch
          %502 = sbr.rel (%p500) target = $region52
        $region51: #{tpu_custom_call.1} parent=47 // pred_region
          %s503 = sand.u32 %s143, 1
          %s504 = scalar_lea.sflag [#allocation3], %s503
          %s505 = sand.u32 %s143, 1
          %s506 = smul.addr %s505, 8
          %s507 = scalar_lea.vmem [#allocation2], %s506
          %508 = dma.done %s504, 128
        $region52: #{tpu_custom_call.1} parent=47 // pred_fallthru
          _
      $region48: #{tpu_custom_call.1} parent=5 // pred_fallthru
        _
    $region6: #{tpu_custom_call.1} parent=1 // loop_footer
      %s18 = sadd.s32 1, %s14
    $region7: #{tpu_custom_call.1} parent=1 // loop_footer_branch
      %13 = sbr.rel target = $region3
    $region8: #{tpu_custom_call.1} parent=1 // loop_exit
      _
    %509 = vsyncpa [#allocation3], 1
    %s510 = scalar_lea.sflag [#allocation3], 1
    %511 = vsyncpa %s510, 1

</llo_original>
